<compile_context>
chip_gen: v7x
topology: tpu7x:2x2x1
jax: 0.10.0
libtpu: 0.0.40
codegen_flags: <defaults>
</compile_context>

<pallas_src>
import math

import jax
import jax.numpy as jnp
from jax.experimental import pallas as pl
from jax.experimental.pallas import tpu as pltpu


def _device_kind() -> str:
    try:
        return jax.devices()[0].device_kind.lower()
    except Exception:
        return ""


def _gen_config():
    """Per-generation knobs: per-buffer tile budget, Pallas crossover, dual-TC."""
    kind = _device_kind()
    if "7" in kind:
        # v7x: 64 MiB physical VMEM (32 MiB scoped default), ~3.2 TB/s HBM, 2 TCs.
        # Keep the 2x(in+out) working set <= ~24 MiB; bigger tiles matter most
        # here because steps are short relative to fixed per-step overhead.
        return {"tile_budget": 5 << 20, "min_elems": 2 * 1024 * 1024,
                "core_parallel": True}
    if "v6" in kind:
        # v6e: 128 MiB physical VMEM (32 MiB scoped default), ~1.4 TB/s HBM.
        return {"tile_budget": 6 << 20, "min_elems": 1024 * 1024,
                "core_parallel": False}
    # v5e / unknown: 128 MiB physical (16 MiB scoped default), ~820 GB/s HBM.
    # Steps are long, so don't over-tile; keep the working set under ~14 MiB.
    return {"tile_budget": 3 << 20, "min_elems": 1024 * 1024,
            "core_parallel": False}


def _local_scaling_kernel(x_ref, gamma_ref, beta_ref, out_ref):
    # Pure VPU work: per-channel scale + shift broadcast over rows.
    x = x_ref[...].astype(jnp.float32)   # (TB, Cp)
    g = gamma_ref[...]                   # (1, Cp) f32, broadcast over sublanes
    b = beta_ref[...]                    # (1, Cp) f32
    out_ref[...] = (x * g + b).astype(out_ref.dtype)


def _pack_factor(C: int, itemsize: int, budget_bytes: int) -> int:
    """Smallest k with (k*C) % 128 == 0; 1 if C already lane-aligned or k*C huge."""
    if C % 128 == 0:
        return 1
    k = 128 // math.gcd(C, 128)
    # Don't pack if even a single packed row would blow the tile budget.
    if k * C * itemsize > budget_bytes:
        return 1
    return k


def _sublane_multiple(itemsize: int) -> int:
    # f32 -> 8 rows/vreg, bf16 -> 16, int8/fp8 -> 32 (packed along sublanes).
    return max(8, 32 // max(1, itemsize))


def _tile_rows(Bp: int, Cp: int, itemsize: int, budget_bytes: int,
               override: int | None) -> int:
    """Row-tile size: fits the byte budget, multiple of the sublane packing
    factor for this dtype, or equal to the full row extent."""
    sub = _sublane_multiple(itemsize)
    if override is not None:
        cap = max(sub, (override // sub) * sub)
    else:
        cap = max(sub, budget_bytes // max(1, Cp * itemsize))
        cap = max(sub, (cap // sub) * sub)
    if Bp <= cap:
        return Bp                      # single block along rows (== full dim)
    return cap                         # ragged last block handled by Pallas


def local_scaling(latent: jax.Array, gamma: jax.Array, beta: jax.Array,
                  *, force_pallas: bool = False,
                  donate_latent: bool = False,
                  tile_rows: int | None = None) -> jax.Array:
    """latent: (B, C); gamma, beta: (C,). Returns (B, C)."""
    B, C = latent.shape
    itemsize = jnp.dtype(latent.dtype).itemsize
    cfg = _gen_config()

    gamma_f32 = gamma.astype(jnp.float32)
    beta_f32 = beta.astype(jnp.float32)

    # Small/medium inputs: skip the kernel; XLA fuses the affine for free and
    # avoids a dedicated HBM round trip.
    if not force_pallas and B * C < cfg["min_elems"]:
        out = latent.astype(jnp.float32) * gamma_f32[None, :] + beta_f32[None, :]
        return out.astype(latent.dtype)

    # Lane-dense packing: fold k rows into one so the last dim is a multiple of
    # 128 lanes (unmasked stores). Pad B up to a multiple of k if needed.
    k = _pack_factor(C, itemsize, cfg["tile_budget"])
    B_pad = ((B + k - 1) // k) * k
    x = latent if B_pad == B else jnp.pad(latent, ((0, B_pad - B), (0, 0)))
    Bp, Cp = B_pad // k, k * C
    x = x.reshape(Bp, Cp)
    g2d = jnp.tile(gamma_f32.reshape(1, C), (1, k))   # (1, Cp)
    b2d = jnp.tile(beta_f32.reshape(1, C), (1, k))    # (1, Cp)

    tb = _tile_rows(Bp, Cp, itemsize, cfg["tile_budget"], tile_rows)
    grid = (pl.cdiv(Bp, tb),)

    # VMEM budget: double-buffered input + output tiles, resident params, slack.
    tile_bytes = tb * Cp * itemsize
    param_bytes = 2 * Cp * 4
    vmem_need = 4 * tile_bytes + 4 * param_bytes + (2 << 20)
    vmem_limit = max(vmem_need, 16 << 20)

    # Dual-TC on v7x only when there is actually more than one grid step.
    if cfg["core_parallel"] and grid[0] >= 2:
        dim_sem = (pltpu.CORE_PARALLEL,)
    else:
        dim_sem = ("parallel",)

    cost = pl.CostEstimate(
        flops=2 * Bp * Cp,
        transcendentals=0,
        bytes_accessed=2 * Bp * Cp * itemsize + 2 * Cp * 4,
    )

    out = pl.pallas_call(
        _local_scaling_kernel,
        out_shape=jax.ShapeDtypeStruct((Bp, Cp), latent.dtype),
        grid=grid,
        in_specs=[
            pl.BlockSpec((tb, Cp), lambda i: (i, 0)),     # tiled batch rows
            pl.BlockSpec((1, Cp), lambda i: (0, 0)),      # gamma: VMEM-resident
            pl.BlockSpec((1, Cp), lambda i: (0, 0)),      # beta:  VMEM-resident
        ],
        out_specs=pl.BlockSpec((tb, Cp), lambda i: (i, 0)),
        compiler_params=pltpu.CompilerParams(
            dimension_semantics=dim_sem,
            vmem_limit_bytes=vmem_limit,
        ),
        cost_estimate=cost,
        input_output_aliases={0: 0} if donate_latent else {},
    )(x, g2d, b2d)

    out = out.reshape(B_pad, C)
    if B_pad != B:
        out = out[:B]
    return out


if __name__ == "__main__":
    key = jax.random.PRNGKey(0)
    k_lat, k_gamma, k_beta = jax.random.split(key, 3)

    # Small shapes consistent with forward(latent): latent (B, C), params (C,)
    B, C = 2, 32
    latent = jax.random.normal(k_lat, (B, C), dtype=jnp.float32)
    gamma = jax.random.normal(k_gamma, (C,), dtype=jnp.float32)   # torch.randn(channels)
    beta = jax.random.normal(k_beta, (C,), dtype=jnp.float32)     # torch.randn(channels)

    ref = latent * gamma[None, :] + beta[None, :]

    # 1) Default path at tiny shape -> XLA fast path (Pallas bypass).
    out_small = jax.block_until_ready(local_scaling(latent, gamma, beta))
    assert out_small.shape == (B, C)
    assert jnp.allclose(out_small, ref, atol=1e-6, rtol=1e-6)

    # 2) Force the Pallas kernel on the same tiny input. C=32 -> k=4, B=2 is
    #    padded to 4 rows so the packed last dim is 128 (unmasked stores).
    out_forced = jax.block_until_ready(
        local_scaling(latent, gamma, beta, force_pallas=True))
    assert out_forced.shape == (B, C)
    assert jnp.allclose(out_forced, ref, atol=1e-6, rtol=1e-6)

    # 3) Larger case exercising lane-dense packing (C=32 -> k=4, Cp=128) and a
    #    multi-step tiled grid (tile_rows=16 -> Bp=64, TB=16, grid=(4,)).
    B2 = 256
    latent2 = jax.random.normal(k_lat, (B2, C), dtype=jnp.float32)
    ref2 = latent2 * gamma[None, :] + beta[None, :]
    out2 = jax.block_until_ready(
        local_scaling(latent2, gamma, beta, force_pallas=True, tile_rows=16))
    assert out2.shape == (B2, C)
    assert jnp.allclose(out2, ref2, atol=1e-6, rtol=1e-6)

    # 4) bf16 latent: f32 compute inside the kernel, cast on store; sublane
    #    rounding uses the bf16 multiple (16 rows).
    B3 = 128
    latent3 = jax.random.normal(k_lat, (B3, C), dtype=jnp.float32).astype(jnp.bfloat16)
    ref3 = (latent3.astype(jnp.float32) * gamma[None, :] + beta[None, :]
            ).astype(jnp.bfloat16)
    out3 = jax.block_until_ready(
        local_scaling(latent3, gamma, beta, force_pallas=True))
    assert out3.shape == (B3, C)
    assert jnp.allclose(out3.astype(jnp.float32), ref3.astype(jnp.float32),
                        atol=1e-2, rtol=1e-2)

    print("KERNEL_OK")
</pallas_src>

<mosaic_0001>
module attributes {stable_mosaic.version = 11 : i64} {
  func.func @_local_scaling_kernel(%arg0: i32, %arg1: memref<1x128xf32, #tpu.memory_space<vmem>>, %arg2: memref<1x128xf32, #tpu.memory_space<vmem>>, %arg3: memref<1x128xf32, #tpu.memory_space<vmem>>, %arg4: memref<1x128xf32, #tpu.memory_space<vmem>>) attributes {dimension_semantics = [#tpu.dimension_semantics<parallel>], iteration_bounds = array<i64: 1>, scalar_prefetch = 0 : i64, scratch_operands = 0 : i64, tpu.core_type = #tpu.core_type<tc>, window_params = [{transform_indices = @transform_0, window_bounds = array<i64: 1, 128>}, {pipeline_mode = #tpu.pipeline_mode<synchronous>, transform_indices = @transform_1, window_bounds = array<i64: 1, 128>}, {pipeline_mode = #tpu.pipeline_mode<synchronous>, transform_indices = @transform_2, window_bounds = array<i64: 1, 128>}, {transform_indices = @transform_3, window_bounds = array<i64: 1, 128>}]} {
    %c0 = arith.constant 0 : index
    %c0_0 = arith.constant 0 : index
    %0 = vector.load %arg1[%c0, %c0_0] : memref<1x128xf32, #tpu.memory_space<vmem>>, vector<1x128xf32>
    %c0_1 = arith.constant 0 : index
    %c0_2 = arith.constant 0 : index
    %1 = vector.load %arg2[%c0_1, %c0_2] : memref<1x128xf32, #tpu.memory_space<vmem>>, vector<1x128xf32>
    %c0_3 = arith.constant 0 : index
    %c0_4 = arith.constant 0 : index
    %2 = vector.load %arg3[%c0_3, %c0_4] : memref<1x128xf32, #tpu.memory_space<vmem>>, vector<1x128xf32>
    %3 = arith.mulf %0, %1 : vector<1x128xf32>
    %4 = arith.addf %3, %2 : vector<1x128xf32>
    %c0_5 = arith.constant 0 : index
    %c0_6 = arith.constant 0 : index
    %5 = vector.load %arg4[%c0_5, %c0_6] : memref<1x128xf32, #tpu.memory_space<vmem>>, vector<1x128xf32>
    tpu.vector_store %arg4[%c0_5, %c0_6], %4 {strides = array<i32>} : memref<1x128xf32, #tpu.memory_space<vmem>>, vector<1x128xf32>,
    return
  }
  func.func @transform_0(%arg0: i32) -> (i32, i32) {
    %c0_i32 = arith.constant 0 : i32
    %c0_i32_0 = arith.constant 0 : i32
    return %arg0, %c0_i32 : i32, i32
  }
  func.func @transform_1(%arg0: i32) -> (i32, i32) {
    %c0_i32 = arith.constant 0 : i32
    %c0_i32_0 = arith.constant 0 : i32
    %c0_i32_1 = arith.constant 0 : i32
    return %c0_i32, %c0_i32_0 : i32, i32
  }
  func.func @transform_2(%arg0: i32) -> (i32, i32) {
    %c0_i32 = arith.constant 0 : i32
    %c0_i32_0 = arith.constant 0 : i32
    %c0_i32_1 = arith.constant 0 : i32
    return %c0_i32, %c0_i32_0 : i32, i32
  }
  func.func @transform_3(%arg0: i32) -> (i32, i32) {
    %c0_i32 = arith.constant 0 : i32
    %c0_i32_0 = arith.constant 0 : i32
    return %arg0, %c0_i32 : i32, i32
  }
}

</mosaic_0001>

<llo_original>
// kernel: tpu_custom_call.1
$region0: #{tpu_custom_call.1}
  #allocation0 [shape = 'u32[]', space=smem, size = 0x4, offset = 0x4, fixed_abs, tag = 'smem constant byte address 0x4 - core index']
  #allocation1 [shape = 'u32[144,128]{1,0:T(1,128)}', space=vmem, size = 0x12000, scoped, tag = 'internal scratch']
  %s0 = inlined_call_operand.hbm [shape: f32[1,128], index: 0, kind: input, shape index: {}]
  %s1 = inlined_call_operand.vmem [shape: f32[1,128], index: 1, kind: input, shape index: {}]
  %s2 = inlined_call_operand.vmem [shape: f32[1,128], index: 2, kind: input, shape index: {}]
  %s3 = inlined_call_operand.hbm [shape: f32[1,128], index: 3, kind: output, shape index: {}]
  %s4 = sld [smem:[#allocation0]]
  $region26: #{tpu_custom_call.1} parent=0
    _
  %s6 = ssub.s32 1, %s4
  %s7 = scalar_select 0, %s6, %s4
  $region1: #{tpu_custom_call.1} parent=0
    #allocation2 [shape = 'u8[512]{0}', space=vmem, size = 0x400, scoped, tag = 'input window, operand 0, single buffered']
    #allocation3 [shape = 's32[1]{0}', space=sflag, size = 0x4, scoped, tag = 'scoped memory for tpu_custom_call.1']
    #allocation4 [shape = 's32[1]{0}', space=sflag, size = 0x4, scoped, tag = 'scoped memory for tpu_custom_call.1']
    #allocation5 [shape = 'u8[512]{0}', space=vmem, size = 0x400, scoped, tag = 'output window, operand 0, single buffered']
    %8 = vsyncpa [#allocation3], 0
    %9 = vsyncpa [#allocation4], 0
    // Predicated region
    $region2: #{tpu_custom_call.1} parent=1 // pred_check
      _
    $region3: #{tpu_custom_call.1} parent=1 // pred_check_branch
      %11 = sbr.rel (0) target = $region5
    $region4: #{tpu_custom_call.1} parent=1 // pred_region
      %s13 = ssub.s32 16, 16
      %14 = vsyncadd [#allocation3], %s13
      %s16 = sshll.u32 [#allocation2], 4
      %s17 = int_to_ptr.vmem [resolvable:$true] %s16
      %19 = dma.hbm_to_vmem [thread:$0]  %s0, 16, %s17, [#allocation3]
    $region5: #{tpu_custom_call.1} parent=1 // pred_fallthru
      _
    // Predicated region
    $region6: #{tpu_custom_call.1} parent=1 // pred_check
      _
    $region7: #{tpu_custom_call.1} parent=1 // pred_check_branch
      %21 = sbr.rel (0) target = $region9
    $region8: #{tpu_custom_call.1} parent=1 // pred_region
      _
    $region9: #{tpu_custom_call.1} parent=1 // pred_fallthru
      _
    // Predicated region
    $region10: #{tpu_custom_call.1} parent=1 // pred_check
      _
    $region11: #{tpu_custom_call.1} parent=1 // pred_check_branch
      %23 = sbr.rel (0) target = $region13
    $region12: #{tpu_custom_call.1} parent=1 // pred_region
      _
    $region13: #{tpu_custom_call.1} parent=1 // pred_fallthru
      _
    // Predicated region
    $region14: #{tpu_custom_call.1} parent=1 // pred_check
      _
    $region15: #{tpu_custom_call.1} parent=1 // pred_check_branch
      %25 = sbr.rel (0) target = $region17
    $region16: #{tpu_custom_call.1} parent=1 // pred_region
      %26 = dma.done [#allocation3], 16
    $region17: #{tpu_custom_call.1} parent=1 // pred_fallthru
      _
    %v27 = vld [vmem:[#allocation2] sm:$0x1]
    %v28 = vld [vmem:[%s1] sm:$0x1]
    %v29 = vld [vmem:[%s2] sm:$0x1]
    %v30 = vmul.f32 %v27, %v28
    %v31 = vadd.f32 %v30, %v29
    %32 = vst [vmem:[#allocation5] sm:$0x1] %v31
    // Predicated region
    $region18: #{tpu_custom_call.1} parent=1 // pred_check
      _
    $region19: #{tpu_custom_call.1} parent=1 // pred_check_branch
      %34 = sbr.rel (0) target = $region21
    $region20: #{tpu_custom_call.1} parent=1 // pred_region
      %s36 = ssub.s32 16, 16
      %37 = vsyncadd [#allocation4], %s36
      %s39 = sshll.u32 [#allocation5], 4
      %s40 = int_to_ptr.vmem [resolvable:$true] %s39
      %42 = dma.vmem_to_hbm [thread:$0]  %s40, 16, %s3, [#allocation4]
    $region21: #{tpu_custom_call.1} parent=1 // pred_fallthru
      _
    // Predicated region
    $region22: #{tpu_custom_call.1} parent=1 // pred_check
      _
    $region23: #{tpu_custom_call.1} parent=1 // pred_check_branch
      %44 = sbr.rel (0) target = $region25
    $region24: #{tpu_custom_call.1} parent=1 // pred_region
      %45 = dma.done [#allocation4], 16
    $region25: #{tpu_custom_call.1} parent=1 // pred_fallthru
      _
    %46 = vsyncpa [#allocation3], 1
    %47 = vsyncpa [#allocation4], 1

</llo_original>
